<compile_context>
chip_gen: v6e
topology: v6e:2x2x1
jax: 0.10.0
libtpu: 0.0.40
codegen_flags: <defaults>
</compile_context>

<pallas_src>
import math

import jax
import jax.numpy as jnp
from jax import lax
from jax.experimental import pallas as pl
from jax.experimental.pallas import tpu as pltpu


def _make_mha_kernel(n_head, head_size):
    def kernel(x_ref, wqkv_ref, bqkv_ref, wp_ref, bp_ref, out_ref):
        # x_ref:   (1, S, E)   one batch element per grid step
        # wqkv_ref:(E, 3*E)    packed [Q | K | V]; 1/sqrt(hs) folded into Q cols
        # bqkv_ref:(1, 3*E)
        # wp_ref:  (E, E)      output projection
        # bp_ref:  (1, E)
        # out_ref: (1, S, E)
        x = x_ref[0]                                   # (S, E)
        s, e = x.shape
        hs = head_size

        # --- fused QKV projection: one lane-dense MXU matmul for all heads ---
        qkv = jnp.dot(x.astype(jnp.bfloat16),
                      wqkv_ref[...].astype(jnp.bfloat16),
                      preferred_element_type=jnp.float32) + bqkv_ref[...]
        qkv = qkv.astype(jnp.bfloat16)                 # single bf16 cast (S, 3E)

        # Split heads with lane slices + a leading-axis stack -> (H, S, Hs).
        # (Avoids lane-dim reshapes; slices / major-dim concat lower cleanly.)
        def split_heads(block_off):
            return jnp.stack(
                [qkv[:, block_off + h * hs: block_off + (h + 1) * hs]
                 for h in range(n_head)], axis=0)

        q = split_heads(0)        # scale already folded into the Q weights
        k = split_heads(e)
        v = split_heads(2 * e)

        # --- scores for all heads in ONE batched MXU einsum: (H, Sq, Sk) ---
        scores = jnp.einsum('hqd,hkd->hqk', q, k,
                            preferred_element_type=jnp.float32)

        # Reference-faithful masking (bugs reproduced exactly): tril==0 ->
        # strict upper triangle filled with +inf, applied ONCE to the batched
        # score tensor.  The reference's divide-by-sqrt(hs) happens after the
        # mask; it is pre-folded into the Q weights (inf stays inf).
        row = lax.broadcasted_iota(jnp.int32, (s, s), 0)
        col = lax.broadcasted_iota(jnp.int32, (s, s), 1)
        scores = jnp.where((col > row)[None], jnp.float32(jnp.inf), scores)

        # Softmax over dim=1 (the QUERY axis -- reference bug, kept), f32
        # throughout with an exact divide so NaN/inf propagation matches torch.
        m = jnp.max(scores, axis=1, keepdims=True)
        ew = jnp.exp(scores - m)
        p = ew / jnp.sum(ew, axis=1, keepdims=True)
        # attention-weight dropout: inference-mode identity.

        # --- P @ V for all heads in ONE batched MXU einsum: (H, Sq, Hs) ---
        ctx = jnp.einsum('hqk,hkd->hqd', p.astype(jnp.bfloat16), v,
                         preferred_element_type=jnp.float32)

        # torch.cat([...], dim=-1): heads back into the lane dim -> (S, E).
        ctx = jnp.concatenate([ctx[h] for h in range(n_head)], axis=-1)

        # --- fused output projection ---
        out = jnp.dot(ctx.astype(jnp.bfloat16),
                      wp_ref[...].astype(jnp.bfloat16),
                      preferred_element_type=jnp.float32) + bp_ref[...]
        # output dropout: inference-mode identity.
        out_ref[...] = out[None].astype(out_ref.dtype)

    return kernel


def multi_head_attention(x, params, *, n_head):
    B, S, E = x.shape
    head_size = E // n_head
    kernel = _make_mha_kernel(n_head, head_size)

    # Advisory cost estimate so XLA schedules/overlaps this custom call well
    # inside a larger jitted graph.
    flops = (2 * B * S * E * 3 * E                     # QKV projection
             + 4 * B * n_head * S * S * head_size      # QK^T and P@V
             + 2 * B * S * E * E)                      # output projection
    bytes_accessed = 4 * (x.size + sum(int(p.size) for p in params.values())
                          + B * S * E)
    transcendentals = B * n_head * S * S               # exp in the softmax

    # TODO(synk): for realistic (large) S, tile over query rows / KV blocks
    # with an online softmax (flash-style scratch accumulators + pl.when
    # init/finalize) and size tiles per generation (64 MiB VMEM on v7x vs
    # 128 MiB on v5e/v6e; tk=128 on v5e, 256 on v6e/v7x).  Unnecessary at
    # S=8, where everything fits in a sliver of VMEM.
    return pl.pallas_call(
        kernel,
        out_shape=jax.ShapeDtypeStruct((B, S, E), jnp.float32),
        grid=(B,),                                     # batch across TCs (v7x)
        in_specs=[
            pl.BlockSpec((1, S, E), lambda b: (b, 0, 0)),
            pl.BlockSpec((E, 3 * E), lambda b: (0, 0)),
            pl.BlockSpec((1, 3 * E), lambda b: (0, 0)),
            pl.BlockSpec((E, E), lambda b: (0, 0)),
            pl.BlockSpec((1, E), lambda b: (0, 0)),
        ],
        out_specs=pl.BlockSpec((1, S, E), lambda b: (b, 0, 0)),
        compiler_params=pltpu.CompilerParams(
            dimension_semantics=("parallel",)),
        cost_estimate=pl.CostEstimate(
            flops=flops, transcendentals=transcendentals,
            bytes_accessed=bytes_accessed),
    )(x, params['wqkv'], params['bqkv'], params['wp'], params['bp'])


def init_params(key, n_embd, n_head, head_size):
    ks = jax.random.split(key, 8)
    bound = 1.0 / math.sqrt(n_embd)

    def u(k, shape):
        return jax.random.uniform(k, shape, jnp.float32, -bound, bound)

    # Per-head nn.Linear-equivalent weights, stored transposed as (E, Hs) so
    # they apply as x @ W; packed once (host-side, init time) into a single
    # (E, 3*H*Hs) QKV matrix with columns [Q_h0..Q_h{H-1} | K_h0.. | V_h0..].
    wq = u(ks[0], (n_head, n_embd, head_size))
    wk = u(ks[1], (n_head, n_embd, head_size))
    wv = u(ks[2], (n_head, n_embd, head_size))
    bq = u(ks[3], (n_head, head_size))
    bk = u(ks[4], (n_head, head_size))
    bv = u(ks[5], (n_head, head_size))

    def pack_w(w):  # (H, E, Hs) -> (E, H*Hs), head h at cols [h*Hs:(h+1)*Hs]
        return jnp.transpose(w, (1, 0, 2)).reshape(n_embd, n_head * head_size)

    # Fold the reference's 1/sqrt(head_size) scale into the Q columns / bias
    # at pack time (one-time host op; numerically identical because the mask
    # fills +inf and inf / sqrt(hs) == inf).
    scale = 1.0 / math.sqrt(head_size)
    wqkv = jnp.concatenate(
        [pack_w(wq) * scale, pack_w(wk), pack_w(wv)], axis=-1)
    bqkv = jnp.concatenate(
        [bq.reshape(1, -1) * scale, bk.reshape(1, -1), bv.reshape(1, -1)],
        axis=-1)

    return {
        'wqkv': wqkv,                        # (E, 3*E)
        'bqkv': bqkv,                        # (1, 3*E)
        'wp': u(ks[6], (n_embd, n_embd)),    # (E, E)
        'bp': u(ks[7], (1, n_embd)),         # (1, E)
    }


def _reference(x, params, *, n_head):
    # Pure-JAX f32 mirror of the (bug-faithful) PyTorch forward, using the
    # same packed params (Q scale already folded in).
    B, S, E = x.shape
    hs = E // n_head
    qkv = jnp.einsum('bse,ef->bsf', x, params['wqkv']) + params['bqkv']
    mask = (jnp.tril(jnp.ones((S, S))) == 0)[None]     # (1, Sq, Sk)
    outs = []
    for h in range(n_head):
        q = qkv[..., h * hs:(h + 1) * hs]
        k = qkv[..., E + h * hs:E + (h + 1) * hs]
        v = qkv[..., 2 * E + h * hs:2 * E + (h + 1) * hs]
        w = jnp.einsum('bqd,bkd->bqk', q, k)
        w = jnp.where(mask, jnp.inf, w)
        m = jnp.max(w, axis=1, keepdims=True)          # softmax over dim=1
        ew = jnp.exp(w - m)
        outs.append(jnp.einsum('bqk,bkd->bqd',
                               ew / jnp.sum(ew, axis=1, keepdims=True), v))
    cat = jnp.concatenate(outs, axis=-1)
    return jnp.einsum('bse,ef->bsf', cat, params['wp']) + params['bp']


if __name__ == "__main__":
    # config: n_embd=32, head=4, head_size=8, block_size=seq_len=8, dropout=0
    B, S = 2, 8
    n_embd, n_head = 32, 4
    head_size = n_embd // n_head

    key = jax.random.PRNGKey(0)
    pkey, xkey = jax.random.split(key)
    params = init_params(pkey, n_embd, n_head, head_size)
    x = jax.random.normal(xkey, (B, S, n_embd), jnp.float32)

    out = multi_head_attention(x, params, n_head=n_head)
    out = jax.block_until_ready(out)

    assert out.shape == (B, S, n_embd)
    assert out.dtype == jnp.float32
    # The reference module's +inf masked_fill followed by softmax over dim=1
    # makes the output NaN-dominated; the kernel reproduces that exactly, so
    # the comparison uses equal_nan=True.
    ref = _reference(x, params, n_head=n_head)
    assert jnp.allclose(out, ref, atol=3e-2, rtol=3e-2, equal_nan=True)
    print("KERNEL_OK")
</pallas_src>

<mosaic_0001>
module attributes {stable_mosaic.version = 11 : i64} {
  func.func @kernel(%arg0: i32, %arg1: memref<1x8x32xf32, #tpu.memory_space<vmem>>, %arg2: memref<32x96xf32, #tpu.memory_space<vmem>>, %arg3: memref<1x96xf32, #tpu.memory_space<vmem>>, %arg4: memref<32x32xf32, #tpu.memory_space<vmem>>, %arg5: memref<1x32xf32, #tpu.memory_space<vmem>>, %arg6: memref<1x8x32xf32, #tpu.memory_space<vmem>>) attributes {dimension_semantics = [#tpu.dimension_semantics<parallel>], iteration_bounds = array<i64: 2>, scalar_prefetch = 0 : i64, scratch_operands = 0 : i64, tpu.core_type = #tpu.core_type<tc>, window_params = [{transform_indices = @transform_0, window_bounds = array<i64: 1, 8, 32>}, {pipeline_mode = #tpu.pipeline_mode<synchronous>, transform_indices = @transform_1, window_bounds = array<i64: 32, 96>}, {pipeline_mode = #tpu.pipeline_mode<synchronous>, transform_indices = @transform_2, window_bounds = array<i64: 1, 96>}, {pipeline_mode = #tpu.pipeline_mode<synchronous>, transform_indices = @transform_3, window_bounds = array<i64: 32, 32>}, {pipeline_mode = #tpu.pipeline_mode<synchronous>, transform_indices = @transform_4, window_bounds = array<i64: 1, 32>}, {transform_indices = @transform_5, window_bounds = array<i64: 1, 8, 32>}]} {
    %c0 = arith.constant 0 : index
    %c0_0 = arith.constant 0 : index
    %c0_1 = arith.constant 0 : index
    %0 = vector.load %arg1[%c0, %c0_0, %c0_1] : memref<1x8x32xf32, #tpu.memory_space<vmem>>, vector<1x8x32xf32>
    %1 = vector.shape_cast %0 : vector<1x8x32xf32> to vector<8x32xf32>
    %2 = arith.truncf %1 : vector<8x32xf32> to vector<8x32xbf16>
    %c0_2 = arith.constant 0 : index
    %c0_3 = arith.constant 0 : index
    %3 = vector.load %arg2[%c0_2, %c0_3] : memref<32x96xf32, #tpu.memory_space<vmem>>, vector<32x96xf32>
    %4 = arith.truncf %3 : vector<32x96xf32> to vector<32x96xbf16>
    %cst = arith.constant dense<0.000000e+00> : vector<8x96xf32>
    %5 = tpu.matmul %2, %4, %cst {dimension_numbers = #tpu.dot_dimension_numbers<[1], [0], [0], [1], [0, 0, 1, 1], [], []>} : vector<8x32xbf16>, vector<32x96xbf16>, vector<8x96xf32> -> vector<8x96xf32>
    %c0_4 = arith.constant 0 : index
    %c0_5 = arith.constant 0 : index
    %6 = vector.load %arg3[%c0_4, %c0_5] : memref<1x96xf32, #tpu.memory_space<vmem>>, vector<1x96xf32>
    %7 = vector.broadcast %6 : vector<1x96xf32> to vector<8x96xf32>
    %8 = arith.addf %5, %7 : vector<8x96xf32>
    %9 = arith.truncf %8 : vector<8x96xf32> to vector<8x96xbf16>
    %10 = vector.extract_strided_slice %9 {offsets = [0, 0], sizes = [8, 8], strides = [1, 1]} : vector<8x96xbf16> to vector<8x8xbf16>
    %11 = vector.extract_strided_slice %9 {offsets = [0, 8], sizes = [8, 8], strides = [1, 1]} : vector<8x96xbf16> to vector<8x8xbf16>
    %12 = vector.extract_strided_slice %9 {offsets = [0, 16], sizes = [8, 8], strides = [1, 1]} : vector<8x96xbf16> to vector<8x8xbf16>
    %13 = vector.extract_strided_slice %9 {offsets = [0, 24], sizes = [8, 8], strides = [1, 1]} : vector<8x96xbf16> to vector<8x8xbf16>
    %14 = vector.shape_cast %10 : vector<8x8xbf16> to vector<1x8x8xbf16>
    %15 = vector.shape_cast %11 : vector<8x8xbf16> to vector<1x8x8xbf16>
    %16 = vector.shape_cast %12 : vector<8x8xbf16> to vector<1x8x8xbf16>
    %17 = vector.shape_cast %13 : vector<8x8xbf16> to vector<1x8x8xbf16>
    %18 = tpu.concatenate %14, %15, %16, %17 in 0 : vector<1x8x8xbf16>, vector<1x8x8xbf16>, vector<1x8x8xbf16>, vector<1x8x8xbf16> -> vector<4x8x8xbf16>
    %19 = vector.extract_strided_slice %9 {offsets = [0, 32], sizes = [8, 8], strides = [1, 1]} : vector<8x96xbf16> to vector<8x8xbf16>
    %20 = vector.extract_strided_slice %9 {offsets = [0, 40], sizes = [8, 8], strides = [1, 1]} : vector<8x96xbf16> to vector<8x8xbf16>
    %21 = vector.extract_strided_slice %9 {offsets = [0, 48], sizes = [8, 8], strides = [1, 1]} : vector<8x96xbf16> to vector<8x8xbf16>
    %22 = vector.extract_strided_slice %9 {offsets = [0, 56], sizes = [8, 8], strides = [1, 1]} : vector<8x96xbf16> to vector<8x8xbf16>
    %23 = vector.shape_cast %19 : vector<8x8xbf16> to vector<1x8x8xbf16>
    %24 = vector.shape_cast %20 : vector<8x8xbf16> to vector<1x8x8xbf16>
    %25 = vector.shape_cast %21 : vector<8x8xbf16> to vector<1x8x8xbf16>
    %26 = vector.shape_cast %22 : vector<8x8xbf16> to vector<1x8x8xbf16>
    %27 = tpu.concatenate %23, %24, %25, %26 in 0 : vector<1x8x8xbf16>, vector<1x8x8xbf16>, vector<1x8x8xbf16>, vector<1x8x8xbf16> -> vector<4x8x8xbf16>
    %28 = vector.extract_strided_slice %9 {offsets = [0, 64], sizes = [8, 8], strides = [1, 1]} : vector<8x96xbf16> to vector<8x8xbf16>
    %29 = vector.extract_strided_slice %9 {offsets = [0, 72], sizes = [8, 8], strides = [1, 1]} : vector<8x96xbf16> to vector<8x8xbf16>
    %30 = vector.extract_strided_slice %9 {offsets = [0, 80], sizes = [8, 8], strides = [1, 1]} : vector<8x96xbf16> to vector<8x8xbf16>
    %31 = vector.extract_strided_slice %9 {offsets = [0, 88], sizes = [8, 8], strides = [1, 1]} : vector<8x96xbf16> to vector<8x8xbf16>
    %32 = vector.shape_cast %28 : vector<8x8xbf16> to vector<1x8x8xbf16>
    %33 = vector.shape_cast %29 : vector<8x8xbf16> to vector<1x8x8xbf16>
    %34 = vector.shape_cast %30 : vector<8x8xbf16> to vector<1x8x8xbf16>
    %35 = vector.shape_cast %31 : vector<8x8xbf16> to vector<1x8x8xbf16>
    %36 = tpu.concatenate %32, %33, %34, %35 in 0 : vector<1x8x8xbf16>, vector<1x8x8xbf16>, vector<1x8x8xbf16>, vector<1x8x8xbf16> -> vector<4x8x8xbf16>
    "tpu.trace_start"() <{level = 10 : i32, message = "hqd,hkd->hqk"}> : () -> ()
    %cst_6 = arith.constant dense<0.000000e+00> : vector<4x8x8xf32>
    %37 = tpu.matmul %18, %27, %cst_6 {dimension_numbers = #tpu.dot_dimension_numbers<[2], [2], [1], [1], [0, 0, 0, 1, 1, 1], [0], [0]>} : vector<4x8x8xbf16>, vector<4x8x8xbf16>, vector<4x8x8xf32> -> vector<4x8x8xf32>
    "tpu.trace_stop"() : () -> ()
    %38 = tpu.iota {dimensions = array<i32: 0>} : vector<8x8xi32>
    %39 = tpu.iota {dimensions = array<i32: 1>} : vector<8x8xi32>
    %40 = arith.cmpi sgt, %39, %38 : vector<8x8xi32>
    %41 = vector.shape_cast %40 : vector<8x8xi1> to vector<1x8x8xi1>
    %cst_7 = arith.constant 0x7F800000 : f32
    %42 = vector.shape_cast %41 : vector<1x8x8xi1> to vector<1x8x8xi1>
    %43 = vector.broadcast %42 : vector<1x8x8xi1> to vector<4x8x8xi1>
    %44 = vector.broadcast %cst_7 : f32 to vector<4x8x8xf32>
    %45 = arith.select %43, %44, %37 : vector<4x8x8xi1>, vector<4x8x8xf32>
    %cst_8 = arith.constant dense<0xFF800000> : vector<4x8xf32>
    %46 = vector.multi_reduction <maximumf>, %45, %cst_8 [1] : vector<4x8x8xf32> to vector<4x8xf32>
    %47 = vector.shape_cast %46 : vector<4x8xf32> to vector<4x1x8xf32>
    %48 = vector.broadcast %47 : vector<4x1x8xf32> to vector<4x8x8xf32>
    %49 = arith.subf %45, %48 : vector<4x8x8xf32>
    %50 = math.exp %49 : vector<4x8x8xf32>
    %cst_9 = arith.constant dense<0.000000e+00> : vector<4x8xf32>
    %51 = vector.multi_reduction <add>, %50, %cst_9 [1] : vector<4x8x8xf32> to vector<4x8xf32>
    %52 = vector.shape_cast %51 : vector<4x8xf32> to vector<4x1x8xf32>
    %53 = vector.broadcast %52 : vector<4x1x8xf32> to vector<4x8x8xf32>
    %54 = arith.divf %50, %53 : vector<4x8x8xf32>
    %55 = arith.truncf %54 : vector<4x8x8xf32> to vector<4x8x8xbf16>
    "tpu.trace_start"() <{level = 10 : i32, message = "hqk,hkd->hqd"}> : () -> ()
    %cst_10 = arith.constant dense<0.000000e+00> : vector<4x8x8xf32>
    %56 = tpu.matmul %55, %36, %cst_10 {dimension_numbers = #tpu.dot_dimension_numbers<[2], [1], [1], [2], [0, 0, 0, 1, 1, 2], [0], [0]>} : vector<4x8x8xbf16>, vector<4x8x8xbf16>, vector<4x8x8xf32> -> vector<4x8x8xf32>
    "tpu.trace_stop"() : () -> ()
    %57 = vector.extract_strided_slice %56 {offsets = [0, 0, 0], sizes = [1, 8, 8], strides = [1, 1, 1]} : vector<4x8x8xf32> to vector<1x8x8xf32>
    %58 = vector.shape_cast %57 : vector<1x8x8xf32> to vector<8x8xf32>
    %59 = vector.extract_strided_slice %56 {offsets = [1, 0, 0], sizes = [1, 8, 8], strides = [1, 1, 1]} : vector<4x8x8xf32> to vector<1x8x8xf32>
    %60 = vector.shape_cast %59 : vector<1x8x8xf32> to vector<8x8xf32>
    %61 = vector.extract_strided_slice %56 {offsets = [2, 0, 0], sizes = [1, 8, 8], strides = [1, 1, 1]} : vector<4x8x8xf32> to vector<1x8x8xf32>
    %62 = vector.shape_cast %61 : vector<1x8x8xf32> to vector<8x8xf32>
    %63 = vector.extract_strided_slice %56 {offsets = [3, 0, 0], sizes = [1, 8, 8], strides = [1, 1, 1]} : vector<4x8x8xf32> to vector<1x8x8xf32>
    %64 = vector.shape_cast %63 : vector<1x8x8xf32> to vector<8x8xf32>
    %65 = tpu.concatenate %58, %60, %62, %64 in 1 : vector<8x8xf32>, vector<8x8xf32>, vector<8x8xf32>, vector<8x8xf32> -> vector<8x32xf32>
    %66 = arith.truncf %65 : vector<8x32xf32> to vector<8x32xbf16>
    %c0_11 = arith.constant 0 : index
    %c0_12 = arith.constant 0 : index
    %67 = vector.load %arg4[%c0_11, %c0_12] : memref<32x32xf32, #tpu.memory_space<vmem>>, vector<32x32xf32>
    %68 = arith.truncf %67 : vector<32x32xf32> to vector<32x32xbf16>
    %cst_13 = arith.constant dense<0.000000e+00> : vector<8x32xf32>
    %69 = tpu.matmul %66, %68, %cst_13 {dimension_numbers = #tpu.dot_dimension_numbers<[1], [0], [0], [1], [0, 0, 1, 1], [], []>} : vector<8x32xbf16>, vector<32x32xbf16>, vector<8x32xf32> -> vector<8x32xf32>
    %c0_14 = arith.constant 0 : index
    %c0_15 = arith.constant 0 : index
    %70 = vector.load %arg5[%c0_14, %c0_15] : memref<1x32xf32, #tpu.memory_space<vmem>>, vector<1x32xf32>
    %71 = vector.broadcast %70 : vector<1x32xf32> to vector<8x32xf32>
    %72 = arith.addf %69, %71 : vector<8x32xf32>
    %73 = vector.shape_cast %72 : vector<8x32xf32> to vector<1x8x32xf32>
    %c0_16 = arith.constant 0 : index
    %c0_17 = arith.constant 0 : index
    %c0_18 = arith.constant 0 : index
    %74 = vector.load %arg6[%c0_16, %c0_17, %c0_18] : memref<1x8x32xf32, #tpu.memory_space<vmem>>, vector<1x8x32xf32>
    tpu.vector_store %arg6[%c0_16, %c0_17, %c0_18], %73 {strides = array<i32>} : memref<1x8x32xf32, #tpu.memory_space<vmem>>, vector<1x8x32xf32>,
    return
  }
  func.func @transform_0(%arg0: i32) -> (i32, i32, i32) {
    %c0_i32 = arith.constant 0 : i32
    %c0_i32_0 = arith.constant 0 : i32
    %c0_i32_1 = arith.constant 0 : i32
    return %arg0, %c0_i32, %c0_i32_0 : i32, i32, i32
  }
  func.func @transform_1(%arg0: i32) -> (i32, i32) {
    %c0_i32 = arith.constant 0 : i32
    %c0_i32_0 = arith.constant 0 : i32
    %c0_i32_1 = arith.constant 0 : i32
    return %c0_i32, %c0_i32_0 : i32, i32
  }
  func.func @transform_2(%arg0: i32) -> (i32, i32) {
    %c0_i32 = arith.constant 0 : i32
    %c0_i32_0 = arith.constant 0 : i32
    %c0_i32_1 = arith.constant 0 : i32
    return %c0_i32, %c0_i32_0 : i32, i32
  }
  func.func @transform_3(%arg0: i32) -> (i32, i32) {
    %c0_i32 = arith.constant 0 : i32
    %c0_i32_0 = arith.constant 0 : i32
    %c0_i32_1 = arith.constant 0 : i32
    return %c0_i32, %c0_i32_0 : i32, i32
  }
  func.func @transform_4(%arg0: i32) -> (i32, i32) {
    %c0_i32 = arith.constant 0 : i32
    %c0_i32_0 = arith.constant 0 : i32
    %c0_i32_1 = arith.constant 0 : i32
    return %c0_i32, %c0_i32_0 : i32, i32
  }
  func.func @transform_5(%arg0: i32) -> (i32, i32, i32) {
    %c0_i32 = arith.constant 0 : i32
    %c0_i32_0 = arith.constant 0 : i32
    %c0_i32_1 = arith.constant 0 : i32
    return %arg0, %c0_i32, %c0_i32_0 : i32, i32, i32
  }
}

</mosaic_0001>

<llo_original>
// kernel: tpu_custom_call.1
$region0: #{tpu_custom_call.1}
  #allocation0 [shape = 'u32[]', space=smem, size = 0x4, offset = 0x4, fixed_abs, tag = 'smem constant byte address 0x4 - core index']
  #allocation1 [shape = 'u32[144,128]{1,0:T(1,128)}', space=vmem, size = 0x12000, scoped, tag = 'internal scratch']
  %s0 = inlined_call_operand.hbm [shape: f32[2,8,32], index: 0, kind: input, shape index: {}]
  %s1 = inlined_call_operand.hbm [shape: f32[32,96], index: 1, kind: input, shape index: {}]
  %s2 = inlined_call_operand.vmem [shape: f32[1,96], index: 2, kind: input, shape index: {}]
  %s3 = inlined_call_operand.hbm [shape: f32[32,32], index: 3, kind: input, shape index: {}]
  %s4 = inlined_call_operand.vmem [shape: f32[1,32], index: 4, kind: input, shape index: {}]
  %s5 = inlined_call_operand.hbm [shape: f32[2,8,32], index: 5, kind: output, shape index: {}]
  %s6 = sld [smem:[#allocation0]]
  $region65: #{tpu_custom_call.1} parent=0
    _
  %s8 = ssub.s32 1, %s6
  %s9 = scalar_select 0, %s8, %s6
  $region1: #{tpu_custom_call.1} parent=0
    #allocation2 [shape = 'u8[8192]{0}', space=vmem, size = 0x2000, scoped, tag = 'input window, operand 0']
    #allocation3 [shape = 's32[2]{0}', space=sflag, size = 0x8, scoped, tag = 'scoped memory for tpu_custom_call.1']
    #allocation4 [shape = 's32[2]{0}', space=sflag, size = 0x8, scoped, tag = 'scoped memory for tpu_custom_call.1']
    #allocation5 [shape = 'u8[16384]{0}', space=vmem, size = 0x4000, scoped, tag = 'input window, operand 1, single buffered']
    #allocation6 [shape = 's32[1]{0}', space=sflag, size = 0x4, scoped, tag = 'scoped memory for tpu_custom_call.1']
    #allocation7 [shape = 'u8[16384]{0}', space=vmem, size = 0x4000, scoped, tag = 'input window, operand 3, single buffered']
    #allocation8 [shape = 'u8[8192]{0}', space=vmem, size = 0x2000, scoped, tag = 'output window, operand 0']
    %10 = vsyncpa [#allocation3], 0
    %s11 = scalar_lea.sflag [#allocation3], 1
    %12 = vsyncpa %s11, 0
    %13 = vsyncpa [#allocation6], 0
    %14 = vsyncpa [#allocation4], 0
    %s15 = scalar_lea.sflag [#allocation4], 1
    %16 = vsyncpa %s15, 0
    loop: start=0, step=1, limit=4
    $region2: #{tpu_custom_call.1} parent=1 // loop_pre_header
      _
    $region3: #{tpu_custom_call.1} parent=1 // loop_header
      %s18 = sphi 0, %s22
      %p19 = scmp.ge.s32.totalorder %s18, 4
      %s28 = sphi 0, %s30
      %s31 = sphi 0, %s28
      %s32 = sphi 0, %s31
      %s48 = sphi 0, %s32
      %s52 = sphi 0, %s52
      %s54 = sphi 0, %s52
      %s55 = sphi 0, %s54
      %s69 = sphi 0, %s55
      %s73 = sphi 0, %s73
      %s75 = sphi 0, %s73
      %s76 = sphi 0, %s75
      %s90 = sphi 0, %s76
      %s94 = sphi 0, %s94
      %s96 = sphi 0, %s94
      %s97 = sphi 0, %s96
      %s111 = sphi 0, %s97
      %s115 = sphi 0, %s115
      %s117 = sphi 0, %s115
      %s118 = sphi 0, %s117
      %s132 = sphi 0, %s118
      %s138 = sphi 0, %s140
      %s141 = sphi 0, %s138
      %s142 = sphi 0, %s141
      %s158 = sphi 0, %s142
    $region4: #{tpu_custom_call.1} parent=1 // loop_header_branch
      %21 = sbr.rel (%p19) target = $region8
    $region5: #{tpu_custom_call.1} parent=1 // loop_body
      %s23 = ssub.s32 %s18, 1
      %s24 = ssub.s32 %s18, 2
      %s25 = sadd.s32 %s18, 1
      %s26 = ssub.s32 %s18, %s25
      %p27 = scmp.eq.s32.totalorder %s26, 0
      %s29 = sadd.s32 %s28, 1
      %s30 = scalar_select %p27, %s28, %s29
      %p33 = pneg %p27
      %p34 = scmp.eq.s32.totalorder %s18, 1
      %p35 = por %p33, %p34
      %p36 = scmp.ne.s32.totalorder %s28, %s31
      %p37 = scmp.eq.s32.totalorder %s18, 0
      %p38 = por %p36, %p37
      %p39 = scmp.ne.s32.totalorder %s28, %s31
      %p40 = scmp.eq.s32.totalorder %s23, 1
      %p41 = por %p39, %p40
      %p42 = scmp.ne.s32.totalorder %s31, %s32
      %p43 = scmp.eq.s32.totalorder %s23, 0
      %p44 = por %p42, %p43
      %p45 = scmp.ne.s32.totalorder %s31, %s32
      %p46 = scmp.eq.s32.totalorder %s24, 1
      %p47 = por %p45, %p46
      %p49 = scmp.ne.s32.totalorder %s32, %s48
      %p50 = scmp.eq.s32.totalorder %s24, 0
      %p51 = por %p49, %p50
      %s53 = sadd.s32 %s52, 1
      %p56 = scmp.eq.s32.totalorder %s18, 1
      %p57 = scmp.ne.s32.totalorder %s52, %s54
      %p58 = scmp.eq.s32.totalorder %s18, 0
      %p59 = por %p57, %p58
      %p60 = scmp.ne.s32.totalorder %s52, %s54
      %p61 = scmp.eq.s32.totalorder %s23, 1
      %p62 = por %p60, %p61
      %p63 = scmp.ne.s32.totalorder %s54, %s55
      %p64 = scmp.eq.s32.totalorder %s23, 0
      %p65 = por %p63, %p64
      %p66 = scmp.ne.s32.totalorder %s54, %s55
      %p67 = scmp.eq.s32.totalorder %s24, 1
      %p68 = por %p66, %p67
      %p70 = scmp.ne.s32.totalorder %s55, %s69
      %p71 = scmp.eq.s32.totalorder %s24, 0
      %p72 = por %p70, %p71
      %s74 = sadd.s32 %s73, 1
      %p77 = scmp.eq.s32.totalorder %s18, 1
      %p78 = scmp.ne.s32.totalorder %s73, %s75
      %p79 = scmp.eq.s32.totalorder %s18, 0
      %p80 = por %p78, %p79
      %p81 = scmp.ne.s32.totalorder %s73, %s75
      %p82 = scmp.eq.s32.totalorder %s23, 1
      %p83 = por %p81, %p82
      %p84 = scmp.ne.s32.totalorder %s75, %s76
      %p85 = scmp.eq.s32.totalorder %s23, 0
      %p86 = por %p84, %p85
      %p87 = scmp.ne.s32.totalorder %s75, %s76
      %p88 = scmp.eq.s32.totalorder %s24, 1
      %p89 = por %p87, %p88
      %p91 = scmp.ne.s32.totalorder %s76, %s90
      %p92 = scmp.eq.s32.totalorder %s24, 0
      %p93 = por %p91, %p92
      %s95 = sadd.s32 %s94, 1
      %p98 = scmp.eq.s32.totalorder %s18, 1
      %p99 = scmp.ne.s32.totalorder %s94, %s96
      %p100 = scmp.eq.s32.totalorder %s18, 0
      %p101 = por %p99, %p100
      %p102 = scmp.ne.s32.totalorder %s94, %s96
      %p103 = scmp.eq.s32.totalorder %s23, 1
      %p104 = por %p102, %p103
      %p105 = scmp.ne.s32.totalorder %s96, %s97
      %p106 = scmp.eq.s32.totalorder %s23, 0
      %p107 = por %p105, %p106
      %p108 = scmp.ne.s32.totalorder %s96, %s97
      %p109 = scmp.eq.s32.totalorder %s24, 1
      %p110 = por %p108, %p109
      %p112 = scmp.ne.s32.totalorder %s97, %s111
      %p113 = scmp.eq.s32.totalorder %s24, 0
      %p114 = por %p112, %p113
      %s116 = sadd.s32 %s115, 1
      %p119 = scmp.eq.s32.totalorder %s18, 1
      %p120 = scmp.ne.s32.totalorder %s115, %s117
      %p121 = scmp.eq.s32.totalorder %s18, 0
      %p122 = por %p120, %p121
      %p123 = scmp.ne.s32.totalorder %s115, %s117
      %p124 = scmp.eq.s32.totalorder %s23, 1
      %p125 = por %p123, %p124
      %p126 = scmp.ne.s32.totalorder %s117, %s118
      %p127 = scmp.eq.s32.totalorder %s23, 0
      %p128 = por %p126, %p127
      %p129 = scmp.ne.s32.totalorder %s117, %s118
      %p130 = scmp.eq.s32.totalorder %s24, 1
      %p131 = por %p129, %p130
      %p133 = scmp.ne.s32.totalorder %s118, %s132
      %p134 = scmp.eq.s32.totalorder %s24, 0
      %p135 = por %p133, %p134
      %s136 = ssub.s32 %s18, %s25
      %p137 = scmp.eq.s32.totalorder %s136, 0
      %s139 = sadd.s32 %s138, 1
      %s140 = scalar_select %p137, %s138, %s139
      %p143 = pneg %p137
      %p144 = scmp.eq.s32.totalorder %s18, 1
      %p145 = por %p143, %p144
      %p146 = scmp.ne.s32.totalorder %s138, %s141
      %p147 = scmp.eq.s32.totalorder %s18, 0
      %p148 = por %p146, %p147
      %p149 = scmp.ne.s32.totalorder %s138, %s141
      %p150 = scmp.eq.s32.totalorder %s23, 1
      %p151 = por %p149, %p150
      %p152 = scmp.ne.s32.totalorder %s141, %s142
      %p153 = scmp.eq.s32.totalorder %s23, 0
      %p154 = por %p152, %p153
      %p155 = scmp.ne.s32.totalorder %s141, %s142
      %p156 = scmp.eq.s32.totalorder %s24, 1
      %p157 = por %p155, %p156
      %p159 = scmp.ne.s32.totalorder %s142, %s158
      %p160 = scmp.eq.s32.totalorder %s24, 0
      %p161 = por %p159, %p160
      %p162 = scmp.le.s32.totalorder 1, %s18
      %p163 = scmp.lt.s32.totalorder %s18, 3
      %p164 = pnand %p162, %p163
      %p165 = pneg %p164
      // Predicated region
      $region9: #{tpu_custom_call.1} parent=5 // pred_check
        _
      $region10: #{tpu_custom_call.1} parent=5 // pred_check_branch
        %167 = sbr.rel (%p164) target = $region12
      $region11: #{tpu_custom_call.1} parent=5 // pred_region
        %s168 = ssub.s32 %s18, 1
        // Predicated region
        $region13: #{tpu_custom_call.1} parent=11 // pred_check
          %p169 = pneg %p65
        $region14: #{tpu_custom_call.1} parent=11 // pred_check_branch
          %171 = sbr.rel (%p169) target = $region16
        $region15: #{tpu_custom_call.1} parent=11 // pred_region
          %s173 = ssub.s32 512, 512
          %174 = vsyncadd [#allocation6], %s173
          %s175 = sshll.u32 [#allocation5], 4
          %s176 = int_to_ptr.vmem [resolvable:$true] %s175
          %181 = dma.hbm_to_vmem [thread:$0]  %s1, 512, %s176, [#allocation6], 128, 128, 8
        $region16: #{tpu_custom_call.1} parent=11 // pred_fallthru
          _
        // Predicated region
        $region17: #{tpu_custom_call.1} parent=11 // pred_check
          %p182 = pneg %p86
        $region18: #{tpu_custom_call.1} parent=11 // pred_check_branch
          %184 = sbr.rel (%p182) target = $region20
        $region19: #{tpu_custom_call.1} parent=11 // pred_region
          _
        $region20: #{tpu_custom_call.1} parent=11 // pred_fallthru
          _
        // Predicated region
        $region21: #{tpu_custom_call.1} parent=11 // pred_check
          %p185 = pneg %p107
        $region22: #{tpu_custom_call.1} parent=11 // pred_check_branch
          %187 = sbr.rel (%p185) target = $region24
        $region23: #{tpu_custom_call.1} parent=11 // pred_region
          %s189 = ssub.s32 512, 512
          %190 = vsyncadd [#allocation6], %s189
          %s191 = sshll.u32 [#allocation7], 4
          %s192 = int_to_ptr.vmem [resolvable:$true] %s191
          %197 = dma.hbm_to_vmem [thread:$0]  %s3, 512, %s192, [#allocation6], 128, 128, 8
        $region24: #{tpu_custom_call.1} parent=11 // pred_fallthru
          _
        // Predicated region
        $region25: #{tpu_custom_call.1} parent=11 // pred_check
          %p198 = pneg %p128
        $region26: #{tpu_custom_call.1} parent=11 // pred_check_branch
          %200 = sbr.rel (%p198) target = $region28
        $region27: #{tpu_custom_call.1} parent=11 // pred_region
          _
        $region28: #{tpu_custom_call.1} parent=11 // pred_fallthru
          _
      $region12: #{tpu_custom_call.1} parent=5 // pred_fallthru
        _
      %p201 = scmp.lt.s32.totalorder %s18, 2
      // Predicated region
      $region29: #{tpu_custom_call.1} parent=5 // pred_check
        %p202 = pneg %p201
      $region30: #{tpu_custom_call.1} parent=5 // pred_check_branch
        %204 = sbr.rel (%p202) target = $region32
      $region31: #{tpu_custom_call.1} parent=5 // pred_region
        // Predicated region
        $region33: #{tpu_custom_call.1} parent=31 // pred_check
          %p205 = pneg %p38
        $region34: #{tpu_custom_call.1} parent=31 // pred_check_branch
          %207 = sbr.rel (%p205) target = $region36
        $region35: #{tpu_custom_call.1} parent=31 // pred_region
          %s208 = sand.u32 %s28, 1
          %s209 = scalar_lea.sflag [#allocation3], %s208
          %s210 = sand.u32 %s28, 1
          %s211 = smul.addr %s210, 8
          %s212 = scalar_lea.vmem [#allocation2], %s211
          %s214 = ssub.s32 128, 128
          %215 = vsyncadd %s209, %s214
          %s216 = smul.addr %s18, 128
          %s217 = scalar_lea.hbm %s0, %s216
          %s219 = sshll.u32 %s212, 4
          %s220 = int_to_ptr.vmem [resolvable:$true] %s219
          %222 = dma.hbm_to_vmem [thread:$0]  %s217, 128, %s220, %s209
        $region36: #{tpu_custom_call.1} parent=31 // pred_fallthru
          _
      $region32: #{tpu_custom_call.1} parent=5 // pred_fallthru
        _
      %p223 = scmp.le.s32.totalorder 1, %s18
      %p224 = scmp.lt.s32.totalorder %s18, 3
      %p225 = pnand %p223, %p224
      %p226 = pneg %p225
      // Predicated region
      $region37: #{tpu_custom_call.1} parent=5 // pred_check
        _
      $region38: #{tpu_custom_call.1} parent=5 // pred_check_branch
        %228 = sbr.rel (%p225) target = $region40
      $region39: #{tpu_custom_call.1} parent=5 // pred_region
        %s229 = ssub.s32 %s18, 1
        %s230 = sand.u32 %s31, 1
        %s231 = scalar_lea.sflag [#allocation3], %s230
        %s232 = sand.u32 %s31, 1
        %s233 = smul.addr %s232, 8
        %s234 = scalar_lea.vmem [#allocation2], %s233
        // Predicated region
        $region41: #{tpu_custom_call.1} parent=39 // pred_check
          %p235 = pneg %p44
        $region42: #{tpu_custom_call.1} parent=39 // pred_check_branch
          %237 = sbr.rel (%p235) target = $region44
        $region43: #{tpu_custom_call.1} parent=39 // pred_region
          %238 = dma.done %s231, 128
        $region44: #{tpu_custom_call.1} parent=39 // pred_fallthru
          _
        // Predicated region
        $region45: #{tpu_custom_call.1} parent=39 // pred_check
          %p239 = pneg %p65
        $region46: #{tpu_custom_call.1} parent=39 // pred_check_branch
          %241 = sbr.rel (%p239) target = $region48
        $region47: #{tpu_custom_call.1} parent=39 // pred_region
          %242 = dma.done [#allocation6], 512
        $region48: #{tpu_custom_call.1} parent=39 // pred_fallthru
          _
        // Predicated region
        $region49: #{tpu_custom_call.1} parent=39 // pred_check
          %p243 = pneg %p107
        $region50: #{tpu_custom_call.1} parent=39 // pred_check_branch
          %245 = sbr.rel (%p243) target = $region52
        $region51: #{tpu_custom_call.1} parent=39 // pred_region
          %246 = dma.done [#allocation6], 512
        $region52: #{tpu_custom_call.1} parent=39 // pred_fallthru
          _
        %s247 = sand.u32 %s31, 1
        %s248 = scalar_lea.sflag [#allocation3], %s247
        %s249 = sand.u32 %s31, 1
        %s250 = smul.addr %s249, 8
        %s251 = scalar_lea.vmem [#allocation2], %s250
        %p252 = pneg %p44
        %p253 = pneg %p41
        %p254 = pneg %p65
        %p255 = pneg %p62
        %p256 = pneg %p86
        %p257 = pneg %p83
        %p258 = pneg %p107
        %p259 = pneg %p104
        %p260 = pneg %p128
        %p261 = pneg %p125
        %p262 = pneg %p154
        %p263 = pneg %p151
        %s264 = sand.u32 %s141, 1
        %s265 = scalar_lea.sflag [#allocation4], %s264
        %s266 = sand.u32 %s141, 1
        %s267 = smul.addr %s266, 8
        %s268 = scalar_lea.vmem [#allocation8], %s267
        %v270 = vld [vmem:[%s234] sm:$0xff]
        %v271 = vpack.c.bf16 %v270, %v270
        %v272 = vld [vmem:[#allocation5] sm:$0xff]
        %v273 = vld [vmem:[#allocation5 + $0x8] sm:$0xff]
        %v274 = vld [vmem:[#allocation5 + $0x10] sm:$0xff]
        %v275 = vld [vmem:[#allocation5 + $0x18] sm:$0xff]
        %v276 = vpack.c.bf16 %v273, %v272
        %v277 = vpack.c.bf16 %v275, %v274
        %v278 = vld [vmem:[%s2] sm:$0x1]
        %v280 = vlaneseq
        %v281 = vshrl.u32 %v280, 7
        %v282 = vsub.s32 0, %v281
        %v283 = vrot.slane %v278, %v282
        %vm285 = vcmask 261120
        %v287 = vsel %vm285, %v271, 0
        %289 = vmatprep.subr.bf16.mxu0 0
        %290 = vmatpush1.bf16.msra.mxu0 0
        %291 = vmatprep.subr.bf16.mxu0 0
        %292 = vmatpush1.bf16.msra.mxu0 0
        %293 = vmatprep.subr.bf16.mxu0 0
        %294 = vmatpush1.bf16.msra.mxu0 0
        %295 = vmatprep.subr.bf16.mxu0 0
        %296 = vmatpush1.bf16.msra.mxu0 0
        %297 = vmatprep.subr.bf16.mxu0 0
        %298 = vmatpush1.bf16.msra.mxu0 0
        %299 = vmatprep.subr.bf16.mxu0 0
        %300 = vmatpush1.bf16.msra.mxu0 0
        %301 = vmatprep.subr.bf16.mxu0 0
        %302 = vmatpush1.bf16.msra.mxu0 %v277
        %303 = vmatprep.subr.bf16.mxu0 0
        %304 = vmatpush1.bf16.msra.mxu0 %v276
        %305 = vmatprep.subr.bf16.mxu0 0
        %306 = vmatpush2.bf16.msra.mxu0 0
        %307 = vmatprep.subr.bf16.mxu0 0
        %308 = vmatpush2.bf16.msra.mxu0 0
        %309 = vmatprep.subr.bf16.mxu0 0
        %310 = vmatpush2.bf16.msra.mxu0 0
        %311 = vmatprep.subr.bf16.mxu0 0
        %312 = vmatpush2.bf16.msra.mxu0 0
        %313 = vmatprep.subr.bf16.mxu0 0
        %314 = vmatpush2.bf16.msra.mxu0 0
        %315 = vmatprep.subr.bf16.mxu0 0
        %316 = vmatpush2.bf16.msra.mxu0 0
        %317 = vmatprep.subr.bf16.mxu0 0
        %318 = vmatpush2.bf16.msra.mxu0 0
        %319 = vmatprep.subr.bf16.mxu0 0
        %320 = vmatpush2.bf16.msra.mxu0 0
        %321 = vmatprep.mubr.bf16.mxu0 0
        %322 = vmatmul.mubr.bf16.gmra.mxu0 %v287
        %v323 = vpop.f32.mrf.mxu0
        %v324 = vadd.f32 %v283, %v323
        %v325 = vpop.f32.mrf.mxu0
        %v326 = vpop.f32.mrf.mxu0
        %v327 = vpop.f32.mrf.mxu0
        %328 = vdwg.mxu0
        %v329 = vpack.c.bf16 %v324, %v324
        %331 = vrot.lane.b32.xlu0 %v329, 120
        %v332 = vpop.permute.xlu0 %331
        %333 = vrot.lane.b32.xlu0 %v329, 112
        %v334 = vpop.permute.xlu0 %333
        %335 = vrot.lane.b32.xlu0 %v329, 104
        %v336 = vpop.permute.xlu0 %335
        %337 = vrot.lane.b32.xlu0 %v329, 96
        %v338 = vpop.permute.xlu0 %337
        %vm339 = vcmask 64512
        %v341 = vsel %vm339, %v329, 0
        %v344 = vsel %vm339, %v338, 0
        %346 = vmatprep.subr.bf16.mxu0 0
        %347 = vmatpush1.bf16.xpose.msra.mxu0 0
        %348 = vmatprep.subr.bf16.mxu0 0
        %349 = vmatpush1.bf16.xpose.msra.mxu0 0
        %350 = vmatprep.subr.bf16.mxu0 0
        %351 = vmatpush1.bf16.xpose.msra.mxu0 0
        %352 = vmatprep.subr.bf16.mxu0 0
        %353 = vmatpush1.bf16.xpose.msra.mxu0 0
        %354 = vmatprep.subr.bf16.mxu0 0
        %355 = vmatpush1.bf16.xpose.msra.mxu0 0
        %356 = vmatprep.subr.bf16.mxu0 0
        %357 = vmatpush1.bf16.xpose.msra.mxu0 0
        %358 = vmatprep.subr.bf16.mxu0 0
        %359 = vmatpush1.bf16.xpose.msra.mxu0 0
        %360 = vmatprep.subr.bf16.mxu0 0
        %361 = vmatpush1.bf16.xpose.msra.mxu0 %v344
        %362 = vmatprep.subr.bf16.mxu0 0
        %363 = vmatpush2.bf16.xpose.msra.mxu0 0
        %364 = vmatprep.subr.bf16.mxu0 0
        %365 = vmatpush2.bf16.xpose.msra.mxu0 0
        %366 = vmatprep.subr.bf16.mxu0 0
        %367 = vmatpush2.bf16.xpose.msra.mxu0 0
        %368 = vmatprep.subr.bf16.mxu0 0
        %369 = vmatpush2.bf16.xpose.msra.mxu0 0
        %370 = vmatprep.subr.bf16.mxu0 0
        %371 = vmatpush2.bf16.xpose.msra.mxu0 0
        %372 = vmatprep.subr.bf16.mxu0 0
        %373 = vmatpush2.bf16.xpose.msra.mxu0 0
        %374 = vmatprep.subr.bf16.mxu0 0
        %375 = vmatpush2.bf16.xpose.msra.mxu0 0
        %376 = vmatprep.subr.bf16.mxu0 0
        %377 = vmatpush2.bf16.xpose.msra.mxu0 0
        %378 = vmatprep.mubr.bf16.mxu0 0
        %379 = vmatmul.mubr.bf16.gmra.mxu0 %v341
        %v380 = vpop.f32.mrf.mxu0
        %v381 = vadd.f32 0.0, %v380
        %v382 = vpop.f32.mrf.mxu0
        %v383 = vpop.f32.mrf.mxu0
        %v384 = vpop.f32.mrf.mxu0
        %385 = vdwg.mxu0
        %386 = vrot.lane.b32.xlu0 %v332, 96
        %v387 = vpop.permute.xlu0 %386
        %v389 = vsel %vm339, %v332, 0
        %v392 = vsel %vm339, %v387, 0
        %394 = vmatprep.subr.bf16.mxu0 0
        %395 = vmatpush1.bf16.xpose.msra.mxu0 0
        %396 = vmatprep.subr.bf16.mxu0 0
        %397 = vmatpush1.bf16.xpose.msra.mxu0 0
        %398 = vmatprep.subr.bf16.mxu0 0
        %399 = vmatpush1.bf16.xpose.msra.mxu0 0
        %400 = vmatprep.subr.bf16.mxu0 0
        %401 = vmatpush1.bf16.xpose.msra.mxu0 0
        %402 = vmatprep.subr.bf16.mxu0 0
        %403 = vmatpush1.bf16.xpose.msra.mxu0 0
        %404 = vmatprep.subr.bf16.mxu0 0
        %405 = vmatpush1.bf16.xpose.msra.mxu0 0
        %406 = vmatprep.subr.bf16.mxu0 0
        %407 = vmatpush1.bf16.xpose.msra.mxu0 0
        %408 = vmatprep.subr.bf16.mxu0 0
        %409 = vmatpush1.bf16.xpose.msra.mxu0 %v392
        %410 = vmatprep.subr.bf16.mxu0 0
        %411 = vmatpush2.bf16.xpose.msra.mxu0 0
        %412 = vmatprep.subr.bf16.mxu0 0
        %413 = vmatpush2.bf16.xpose.msra.mxu0 0
        %414 = vmatprep.subr.bf16.mxu0 0
        %415 = vmatpush2.bf16.xpose.msra.mxu0 0
        %416 = vmatprep.subr.bf16.mxu0 0
        %417 = vmatpush2.bf16.xpose.msra.mxu0 0
        %418 = vmatprep.subr.bf16.mxu0 0
        %419 = vmatpush2.bf16.xpose.msra.mxu0 0
        %420 = vmatprep.subr.bf16.mxu0 0
        %421 = vmatpush2.bf16.xpose.msra.mxu0 0
        %422 = vmatprep.subr.bf16.mxu0 0
        %423 = vmatpush2.bf16.xpose.msra.mxu0 0
        %424 = vmatprep.subr.bf16.mxu0 0
        %425 = vmatpush2.bf16.xpose.msra.mxu0 0
        %426 = vmatprep.mubr.bf16.mxu0 0
        %427 = vmatmul.mubr.bf16.gmra.mxu0 %v389
        %v428 = vpop.f32.mrf.mxu0
        %v429 = vadd.f32 0.0, %v428
        %v430 = vpop.f32.mrf.mxu0
        %v431 = vpop.f32.mrf.mxu0
        %v432 = vpop.f32.mrf.mxu0
        %433 = vdwg.mxu0
        %434 = vrot.lane.b32.xlu0 %v334, 96
        %v435 = vpop.permute.xlu0 %434
        %v437 = vsel %vm339, %v334, 0
        %v440 = vsel %vm339, %v435, 0
        %442 = vmatprep.subr.bf16.mxu0 0
        %443 = vmatpush1.bf16.xpose.msra.mxu0 0
        %444 = vmatprep.subr.bf16.mxu0 0
        %445 = vmatpush1.bf16.xpose.msra.mxu0 0
        %446 = vmatprep.subr.bf16.mxu0 0
        %447 = vmatpush1.bf16.xpose.msra.mxu0 0
        %448 = vmatprep.subr.bf16.mxu0 0
        %449 = vmatpush1.bf16.xpose.msra.mxu0 0
        %450 = vmatprep.subr.bf16.mxu0 0
        %451 = vmatpush1.bf16.xpose.msra.mxu0 0
        %452 = vmatprep.subr.bf16.mxu0 0
        %453 = vmatpush1.bf16.xpose.msra.mxu0 0
        %454 = vmatprep.subr.bf16.mxu0 0
        %455 = vmatpush1.bf16.xpose.msra.mxu0 0
        %456 = vmatprep.subr.bf16.mxu0 0
        %457 = vmatpush1.bf16.xpose.msra.mxu0 %v440
        %458 = vmatprep.subr.bf16.mxu0 0
        %459 = vmatpush2.bf16.xpose.msra.mxu0 0
        %460 = vmatprep.subr.bf16.mxu0 0
        %461 = vmatpush2.bf16.xpose.msra.mxu0 0
        %462 = vmatprep.subr.bf16.mxu0 0
        %463 = vmatpush2.bf16.xpose.msra.mxu0 0
        %464 = vmatprep.subr.bf16.mxu0 0
        %465 = vmatpush2.bf16.xpose.msra.mxu0 0
        %466 = vmatprep.subr.bf16.mxu0 0
        %467 = vmatpush2.bf16.xpose.msra.mxu0 0
        %468 = vmatprep.subr.bf16.mxu0 0
        %469 = vmatpush2.bf16.xpose.msra.mxu0 0
        %470 = vmatprep.subr.bf16.mxu0 0
        %471 = vmatpush2.bf16.xpose.msra.mxu0 0
        %472 = vmatprep.subr.bf16.mxu0 0
        %473 = vmatpush2.bf16.xpose.msra.mxu0 0
        %474 = vmatprep.mubr.bf16.mxu0 0
        %475 = vmatmul.mubr.bf16.gmra.mxu0 %v437
        %v476 = vpop.f32.mrf.mxu0
        %v477 = vadd.f32 0.0, %v476
        %v478 = vpop.f32.mrf.mxu0
        %v479 = vpop.f32.mrf.mxu0
        %v480 = vpop.f32.mrf.mxu0
        %481 = vdwg.mxu0
        %482 = vrot.lane.b32.xlu0 %v336, 96
        %v483 = vpop.permute.xlu0 %482
        %v485 = vsel %vm339, %v336, 0
        %v488 = vsel %vm339, %v483, 0
        %490 = vmatprep.subr.bf16.mxu0 0
        %491 = vmatpush1.bf16.xpose.msra.mxu0 0
        %492 = vmatprep.subr.bf16.mxu0 0
        %493 = vmatpush1.bf16.xpose.msra.mxu0 0
        %494 = vmatprep.subr.bf16.mxu0 0
        %495 = vmatpush1.bf16.xpose.msra.mxu0 0
        %496 = vmatprep.subr.bf16.mxu0 0
        %497 = vmatpush1.bf16.xpose.msra.mxu0 0
        %498 = vmatprep.subr.bf16.mxu0 0
        %499 = vmatpush1.bf16.xpose.msra.mxu0 0
        %500 = vmatprep.subr.bf16.mxu0 0
        %501 = vmatpush1.bf16.xpose.msra.mxu0 0
        %502 = vmatprep.subr.bf16.mxu0 0
        %503 = vmatpush1.bf16.xpose.msra.mxu0 0
        %504 = vmatprep.subr.bf16.mxu0 0
        %505 = vmatpush1.bf16.xpose.msra.mxu0 %v488
        %506 = vmatprep.subr.bf16.mxu0 0
        %507 = vmatpush2.bf16.xpose.msra.mxu0 0
        %508 = vmatprep.subr.bf16.mxu0 0
        %509 = vmatpush2.bf16.xpose.msra.mxu0 0
        %510 = vmatprep.subr.bf16.mxu0 0
        %511 = vmatpush2.bf16.xpose.msra.mxu0 0
        %512 = vmatprep.subr.bf16.mxu0 0
        %513 = vmatpush2.bf16.xpose.msra.mxu0 0
        %514 = vmatprep.subr.bf16.mxu0 0
        %515 = vmatpush2.bf16.xpose.msra.mxu0 0
        %516 = vmatprep.subr.bf16.mxu0 0
        %517 = vmatpush2.bf16.xpose.msra.mxu0 0
        %518 = vmatprep.subr.bf16.mxu0 0
        %519 = vmatpush2.bf16.xpose.msra.mxu0 0
        %520 = vmatprep.subr.bf16.mxu0 0
        %521 = vmatpush2.bf16.xpose.msra.mxu0 0
        %522 = vmatprep.mubr.bf16.mxu0 0
        %523 = vmatmul.mubr.bf16.gmra.mxu0 %v485
        %v524 = vpop.f32.mrf.mxu0
        %v525 = vadd.f32 0.0, %v524
        %v526 = vpop.f32.mrf.mxu0
        %v527 = vpop.f32.mrf.mxu0
        %v528 = vpop.f32.mrf.mxu0
        %529 = vdwg.mxu0
        %v530 = vlaneseq
        %v531 = vshrl.u32 %v530, 7
        %v532 = vlaneseq
        %v533 = vand.u32 %v532, 127
        %vm534 = vcmp.gt.s32.totalorder %v533, %v531
        %v535 = vsel %vm534, 1, 0
        %vm536 = vcmp.eq.s32.totalorder %v535, 1
        %v537 = vsel %vm536, inf, %v381
        %v538 = vsel %vm536, inf, %v429
        %v539 = vsel %vm536, inf, %v477
        %v540 = vsel %vm536, inf, %v525
        %v541 = vsel %vm339, %v537, -inf
        %v542 = vrot.slane %v541, 4
        %v543 = vmax.f32 %v541, %v542
        %v544 = vrot.slane %v543, 2
        %v545 = vmax.f32 %v543, %v544
        %v546 = vrot.slane %v545, 1
        %v547 = vmax.f32 %v545, %v546
        %v548 = vsel %vm339, %v538, -inf
        %v549 = vrot.slane %v548, 4
        %v550 = vmax.f32 %v548, %v549
        %v551 = vrot.slane %v550, 2
        %v552 = vmax.f32 %v550, %v551
        %v553 = vrot.slane %v552, 1
        %v554 = vmax.f32 %v552, %v553
        %v555 = vsel %vm339, %v539, -inf
        %v556 = vrot.slane %v555, 4
        %v557 = vmax.f32 %v555, %v556
        %v558 = vrot.slane %v557, 2
        %v559 = vmax.f32 %v557, %v558
        %v560 = vrot.slane %v559, 1
        %v561 = vmax.f32 %v559, %v560
        %v562 = vsel %vm339, %v540, -inf
        %v563 = vrot.slane %v562, 4
        %v564 = vmax.f32 %v562, %v563
        %v565 = vrot.slane %v564, 2
        %v566 = vmax.f32 %v564, %v565
        %v567 = vrot.slane %v566, 1
        %v568 = vmax.f32 %v566, %v567
        %v569 = vsub.f32 %v537, %v547
        %v570 = vsub.f32 %v538, %v554
        %v571 = vsub.f32 %v539, %v561
        %v572 = vsub.f32 %v540, %v568
        %v573 = vmul.f32 %v569, 1.442695
        %v574 = vpow.pop %v573
        %v575 = vmul.f32 %v570, 1.442695
        %v576 = vpow.pop %v575
        %v577 = vmul.f32 %v571, 1.442695
        %v578 = vpow.pop %v577
        %v579 = vmul.f32 %v572, 1.442695
        %v580 = vpow.pop %v579
        %v581 = vsel %vm339, %v574, 0.0
        %v582 = vrot.slane %v581, 4
        %v583 = vadd.f32 %v581, %v582
        %v584 = vrot.slane %v583, 2
        %v585 = vadd.f32 %v583, %v584
        %v586 = vrot.slane %v585, 1
        %v587 = vadd.f32 %v585, %v586
        %v588 = vsel %vm339, %v576, 0.0
        %v589 = vrot.slane %v588, 4
        %v590 = vadd.f32 %v588, %v589
        %v591 = vrot.slane %v590, 2
        %v592 = vadd.f32 %v590, %v591
        %v593 = vrot.slane %v592, 1
        %v594 = vadd.f32 %v592, %v593
        %v595 = vsel %vm339, %v578, 0.0
        %v596 = vrot.slane %v595, 4
        %v597 = vadd.f32 %v595, %v596
        %v598 = vrot.slane %v597, 2
        %v599 = vadd.f32 %v597, %v598
        %v600 = vrot.slane %v599, 1
        %v601 = vadd.f32 %v599, %v600
        %v602 = vsel %vm339, %v580, 0.0
        %v603 = vrot.slane %v602, 4
        %v604 = vadd.f32 %v602, %v603
        %v605 = vrot.slane %v604, 2
        %v606 = vadd.f32 %v604, %v605
        %v607 = vrot.slane %v606, 1
        %v608 = vadd.f32 %v606, %v607
        %v609 = vrcp.pop %v587
        %v610 = vmul.f32 %v574, %v609
        %v611 = vrcp.pop %v594
        %v612 = vmul.f32 %v576, %v611
        %v613 = vrcp.pop %v601
        %v614 = vmul.f32 %v578, %v613
        %v615 = vrcp.pop %v608
        %v616 = vmul.f32 %v580, %v615
        %v617 = vpack.c.bf16 %v610, %v610
        %v618 = vpack.c.bf16 %v612, %v612
        %v619 = vpack.c.bf16 %v614, %v614
        %v620 = vpack.c.bf16 %v616, %v616
        %621 = vrot.lane.b32.xlu0 %v329, 64
        %v622 = vpop.permute.xlu0 %621
        %v624 = vsel %vm339, %v617, 0
        %vm626 = vcmask 1043456
        %v628 = vsel %vm626, %v622, 0
        %630 = vmatprep.subr.bf16.mxu0 0
        %631 = vmatpush1.bf16.msra.mxu0 0
        %632 = vmatprep.subr.bf16.mxu0 0
        %633 = vmatpush1.bf16.msra.mxu0 0
        %634 = vmatprep.subr.bf16.mxu0 0
        %635 = vmatpush1.bf16.msra.mxu0 0
        %636 = vmatprep.subr.bf16.mxu0 0
        %637 = vmatpush1.bf16.msra.mxu0 0
        %638 = vmatprep.subr.bf16.mxu0 0
        %639 = vmatpush1.bf16.msra.mxu0 0
        %640 = vmatprep.subr.bf16.mxu0 0
        %641 = vmatpush1.bf16.msra.mxu0 0
        %642 = vmatprep.subr.bf16.mxu0 0
        %643 = vmatpush1.bf16.msra.mxu0 0
        %644 = vmatprep.subr.bf16.mxu0 0
        %645 = vmatpush1.bf16.msra.mxu0 %v628
        %646 = vmatprep.subr.bf16.mxu0 0
        %647 = vmatpush2.bf16.msra.mxu0 0
        %648 = vmatprep.subr.bf16.mxu0 0
        %649 = vmatpush2.bf16.msra.mxu0 0
        %650 = vmatprep.subr.bf16.mxu0 0
        %651 = vmatpush2.bf16.msra.mxu0 0
        %652 = vmatprep.subr.bf16.mxu0 0
        %653 = vmatpush2.bf16.msra.mxu0 0
        %654 = vmatprep.subr.bf16.mxu0 0
        %655 = vmatpush2.bf16.msra.mxu0 0
        %656 = vmatprep.subr.bf16.mxu0 0
        %657 = vmatpush2.bf16.msra.mxu0 0
        %658 = vmatprep.subr.bf16.mxu0 0
        %659 = vmatpush2.bf16.msra.mxu0 0
        %660 = vmatprep.subr.bf16.mxu0 0
        %661 = vmatpush2.bf16.msra.mxu0 0
        %662 = vmatprep.mubr.bf16.mxu0 0
        %663 = vmatmul.mubr.bf16.gmra.mxu0 %v624
        %v664 = vpop.f32.mrf.mxu0
        %v665 = vadd.f32 0.0, %v664
        %v666 = vpop.f32.mrf.mxu0
        %v667 = vpop.f32.mrf.mxu0
        %v668 = vpop.f32.mrf.mxu0
        %669 = vdwg.mxu0
        %670 = vrot.lane.b32.xlu0 %v332, 64
        %v671 = vpop.permute.xlu0 %670
        %v673 = vsel %vm339, %v618, 0
        %v676 = vsel %vm626, %v671, 0
        %678 = vmatprep.subr.bf16.mxu0 0
        %679 = vmatpush1.bf16.msra.mxu0 0
        %680 = vmatprep.subr.bf16.mxu0 0
        %681 = vmatpush1.bf16.msra.mxu0 0
        %682 = vmatprep.subr.bf16.mxu0 0
        %683 = vmatpush1.bf16.msra.mxu0 0
        %684 = vmatprep.subr.bf16.mxu0 0
        %685 = vmatpush1.bf16.msra.mxu0 0
        %686 = vmatprep.subr.bf16.mxu0 0
        %687 = vmatpush1.bf16.msra.mxu0 0
        %688 = vmatprep.subr.bf16.mxu0 0
        %689 = vmatpush1.bf16.msra.mxu0 0
        %690 = vmatprep.subr.bf16.mxu0 0
        %691 = vmatpush1.bf16.msra.mxu0 0
        %692 = vmatprep.subr.bf16.mxu0 0
        %693 = vmatpush1.bf16.msra.mxu0 %v676
        %694 = vmatprep.subr.bf16.mxu0 0
        %695 = vmatpush2.bf16.msra.mxu0 0
        %696 = vmatprep.subr.bf16.mxu0 0
        %697 = vmatpush2.bf16.msra.mxu0 0
        %698 = vmatprep.subr.bf16.mxu0 0
        %699 = vmatpush2.bf16.msra.mxu0 0
        %700 = vmatprep.subr.bf16.mxu0 0
        %701 = vmatpush2.bf16.msra.mxu0 0
        %702 = vmatprep.subr.bf16.mxu0 0
        %703 = vmatpush2.bf16.msra.mxu0 0
        %704 = vmatprep.subr.bf16.mxu0 0
        %705 = vmatpush2.bf16.msra.mxu0 0
        %706 = vmatprep.subr.bf16.mxu0 0
        %707 = vmatpush2.bf16.msra.mxu0 0
        %708 = vmatprep.subr.bf16.mxu0 0
        %709 = vmatpush2.bf16.msra.mxu0 0
        %710 = vmatprep.mubr.bf16.mxu0 0
        %711 = vmatmul.mubr.bf16.gmra.mxu0 %v673
        %v712 = vpop.f32.mrf.mxu0
        %v713 = vadd.f32 0.0, %v712
        %v714 = vpop.f32.mrf.mxu0
        %v715 = vpop.f32.mrf.mxu0
        %v716 = vpop.f32.mrf.mxu0
        %717 = vdwg.mxu0
        %718 = vrot.lane.b32.xlu0 %v334, 64
        %v719 = vpop.permute.xlu0 %718
        %v721 = vsel %vm339, %v619, 0
        %v724 = vsel %vm626, %v719, 0
        %726 = vmatprep.subr.bf16.mxu0 0
        %727 = vmatpush1.bf16.msra.mxu0 0
        %728 = vmatprep.subr.bf16.mxu0 0
        %729 = vmatpush1.bf16.msra.mxu0 0
        %730 = vmatprep.subr.bf16.mxu0 0
        %731 = vmatpush1.bf16.msra.mxu0 0
        %732 = vmatprep.subr.bf16.mxu0 0
        %733 = vmatpush1.bf16.msra.mxu0 0
        %734 = vmatprep.subr.bf16.mxu0 0
        %735 = vmatpush1.bf16.msra.mxu0 0
        %736 = vmatprep.subr.bf16.mxu0 0
        %737 = vmatpush1.bf16.msra.mxu0 0
        %738 = vmatprep.subr.bf16.mxu0 0
        %739 = vmatpush1.bf16.msra.mxu0 0
        %740 = vmatprep.subr.bf16.mxu0 0
        %741 = vmatpush1.bf16.msra.mxu0 %v724
        %742 = vmatprep.subr.bf16.mxu0 0
        %743 = vmatpush2.bf16.msra.mxu0 0
        %744 = vmatprep.subr.bf16.mxu0 0
        %745 = vmatpush2.bf16.msra.mxu0 0
        %746 = vmatprep.subr.bf16.mxu0 0
        %747 = vmatpush2.bf16.msra.mxu0 0
        %748 = vmatprep.subr.bf16.mxu0 0
        %749 = vmatpush2.bf16.msra.mxu0 0
        %750 = vmatprep.subr.bf16.mxu0 0
        %751 = vmatpush2.bf16.msra.mxu0 0
        %752 = vmatprep.subr.bf16.mxu0 0
        %753 = vmatpush2.bf16.msra.mxu0 0
        %754 = vmatprep.subr.bf16.mxu0 0
        %755 = vmatpush2.bf16.msra.mxu0 0
        %756 = vmatprep.subr.bf16.mxu0 0
        %757 = vmatpush2.bf16.msra.mxu0 0
        %758 = vmatprep.mubr.bf16.mxu0 0
        %759 = vmatmul.mubr.bf16.gmra.mxu0 %v721
        %v760 = vpop.f32.mrf.mxu0
        %v761 = vadd.f32 0.0, %v760
        %v762 = vpop.f32.mrf.mxu0
        %v763 = vpop.f32.mrf.mxu0
        %v764 = vpop.f32.mrf.mxu0
        %765 = vdwg.mxu0
        %766 = vrot.lane.b32.xlu0 %v336, 64
        %v767 = vpop.permute.xlu0 %766
        %v769 = vsel %vm339, %v620, 0
        %v772 = vsel %vm626, %v767, 0
        %774 = vmatprep.subr.bf16.mxu0 0
        %775 = vmatpush1.bf16.msra.mxu0 0
        %776 = vmatprep.subr.bf16.mxu0 0
        %777 = vmatpush1.bf16.msra.mxu0 0
        %778 = vmatprep.subr.bf16.mxu0 0
        %779 = vmatpush1.bf16.msra.mxu0 0
        %780 = vmatprep.subr.bf16.mxu0 0
        %781 = vmatpush1.bf16.msra.mxu0 0
        %782 = vmatprep.subr.bf16.mxu0 0
        %783 = vmatpush1.bf16.msra.mxu0 0
        %784 = vmatprep.subr.bf16.mxu0 0
        %785 = vmatpush1.bf16.msra.mxu0 0
        %786 = vmatprep.subr.bf16.mxu0 0
        %787 = vmatpush1.bf16.msra.mxu0 0
        %788 = vmatprep.subr.bf16.mxu0 0
        %789 = vmatpush1.bf16.msra.mxu0 %v772
        %790 = vmatprep.subr.bf16.mxu0 0
        %791 = vmatpush2.bf16.msra.mxu0 0
        %792 = vmatprep.subr.bf16.mxu0 0
        %793 = vmatpush2.bf16.msra.mxu0 0
        %794 = vmatprep.subr.bf16.mxu0 0
        %795 = vmatpush2.bf16.msra.mxu0 0
        %796 = vmatprep.subr.bf16.mxu0 0
        %797 = vmatpush2.bf16.msra.mxu0 0
        %798 = vmatprep.subr.bf16.mxu0 0
        %799 = vmatpush2.bf16.msra.mxu0 0
        %800 = vmatprep.subr.bf16.mxu0 0
        %801 = vmatpush2.bf16.msra.mxu0 0
        %802 = vmatprep.subr.bf16.mxu0 0
        %803 = vmatpush2.bf16.msra.mxu0 0
        %804 = vmatprep.subr.bf16.mxu0 0
        %805 = vmatpush2.bf16.msra.mxu0 0
        %806 = vmatprep.mubr.bf16.mxu0 0
        %807 = vmatmul.mubr.bf16.gmra.mxu0 %v769
        %v808 = vpop.f32.mrf.mxu0
        %v809 = vadd.f32 0.0, %v808
        %v810 = vpop.f32.mrf.mxu0
        %v811 = vpop.f32.mrf.mxu0
        %v812 = vpop.f32.mrf.mxu0
        %813 = vdwg.mxu0
        %815 = vrot.lane.b32.xlu0 %v713, 8
        %v816 = vpop.permute.xlu0 %815
        %819 = vrot.lane.b32.xlu0 %v761, 16
        %v820 = vpop.permute.xlu0 %819
        %823 = vrot.lane.b32.xlu0 %v809, 24
        %v824 = vpop.permute.xlu0 %823
        %v826 = vsel %vm339, %v665, %v816
        %vm827 = vcmask 130048
        %v828 = vsel %vm827, %v826, %v820
        %vm829 = vcmask 195584
        %v830 = vsel %vm829, %v828, %v824
        %v831 = vpack.c.bf16 %v830, %v830
        %v832 = vld [vmem:[#allocation7] sm:$0xff]
        %v833 = vld [vmem:[#allocation7 + $0x8] sm:$0xff]
        %v834 = vld [vmem:[#allocation7 + $0x10] sm:$0xff]
        %v835 = vld [vmem:[#allocation7 + $0x18] sm:$0xff]
        %v836 = vpack.c.bf16 %v833, %v832
        %v837 = vpack.c.bf16 %v835, %v834
        %v838 = vld [vmem:[%s4] sm:$0x1]
        %v840 = vlaneseq
        %v841 = vshrl.u32 %v840, 7
        %v842 = vsub.s32 0, %v841
        %v843 = vrot.slane %v838, %v842
        %v846 = vsel %vm285, %v831, 0
        %848 = vmatprep.subr.bf16.mxu0 0
        %849 = vmatpush1.bf16.msra.mxu0 0
        %850 = vmatprep.subr.bf16.mxu0 0
        %851 = vmatpush1.bf16.msra.mxu0 0
        %852 = vmatprep.subr.bf16.mxu0 0
        %853 = vmatpush1.bf16.msra.mxu0 0
        %854 = vmatprep.subr.bf16.mxu0 0
        %855 = vmatpush1.bf16.msra.mxu0 0
        %856 = vmatprep.subr.bf16.mxu0 0
        %857 = vmatpush1.bf16.msra.mxu0 0
        %858 = vmatprep.subr.bf16.mxu0 0
        %859 = vmatpush1.bf16.msra.mxu0 0
        %860 = vmatprep.subr.bf16.mxu0 0
        %861 = vmatpush1.bf16.msra.mxu0 %v837
        %862 = vmatprep.subr.bf16.mxu0 0
        %863 = vmatpush1.bf16.msra.mxu0 %v836
        %864 = vmatprep.subr.bf16.mxu0 0
        %865 = vmatpush2.bf16.msra.mxu0 0
        %866 = vmatprep.subr.bf16.mxu0 0
        %867 = vmatpush2.bf16.msra.mxu0 0
        %868 = vmatprep.subr.bf16.mxu0 0
        %869 = vmatpush2.bf16.msra.mxu0 0
        %870 = vmatprep.subr.bf16.mxu0 0
        %871 = vmatpush2.bf16.msra.mxu0 0
        %872 = vmatprep.subr.bf16.mxu0 0
        %873 = vmatpush2.bf16.msra.mxu0 0
        %874 = vmatprep.subr.bf16.mxu0 0
        %875 = vmatpush2.bf16.msra.mxu0 0
        %876 = vmatprep.subr.bf16.mxu0 0
        %877 = vmatpush2.bf16.msra.mxu0 0
        %878 = vmatprep.subr.bf16.mxu0 0
        %879 = vmatpush2.bf16.msra.mxu0 0
        %880 = vmatprep.mubr.bf16.mxu0 0
        %881 = vmatmul.mubr.bf16.gmra.mxu0 %v846
        %v882 = vpop.f32.mrf.mxu0
        %v883 = vadd.f32 %v843, %v882
        %v884 = vpop.f32.mrf.mxu0
        %v885 = vpop.f32.mrf.mxu0
        %v886 = vpop.f32.mrf.mxu0
        %887 = vdwg.mxu0
        %888 = vst.msk [vmem:[%s268] sm:$0xff] %vm285, %v883
        %s889 = sand.u32 %s141, 1
        %s890 = scalar_lea.sflag [#allocation4], %s889
        %s891 = sand.u32 %s141, 1
        %s892 = smul.addr %s891, 8
        %s893 = scalar_lea.vmem [#allocation8], %s892
        // Predicated region
        $region53: #{tpu_custom_call.1} parent=39 // pred_check
          %p894 = pneg %p151
        $region54: #{tpu_custom_call.1} parent=39 // pred_check_branch
          %896 = sbr.rel (%p894) target = $region56
        $region55: #{tpu_custom_call.1} parent=39 // pred_region
          %s898 = ssub.s32 128, 128
          %899 = vsyncadd %s890, %s898
          %s900 = smul.addr %s23, 128
          %s901 = scalar_lea.hbm %s5, %s900
          %s903 = sshll.u32 %s893, 4
          %s904 = int_to_ptr.vmem [resolvable:$true] %s903
          %906 = dma.vmem_to_hbm [thread:$0]  %s904, 128, %s901, %s890
        $region56: #{tpu_custom_call.1} parent=39 // pred_fallthru
          _
      $region40: #{tpu_custom_call.1} parent=5 // pred_fallthru
        _
      %p907 = scmp.le.s32.totalorder 2, %s18
      // Predicated region
      $region57: #{tpu_custom_call.1} parent=5 // pred_check
        %p908 = pneg %p907
      $region58: #{tpu_custom_call.1} parent=5 // pred_check_branch
        %910 = sbr.rel (%p908) target = $region60
      $region59: #{tpu_custom_call.1} parent=5 // pred_region
        %s911 = ssub.s32 %s18, 2
        // Predicated region
        $region61: #{tpu_custom_call.1} parent=59 // pred_check
          %p912 = pneg %p157
        $region62: #{tpu_custom_call.1} parent=59 // pred_check_branch
          %914 = sbr.rel (%p912) target = $region64
        $region63: #{tpu_custom_call.1} parent=59 // pred_region
          %s915 = sand.u32 %s142, 1
          %s916 = scalar_lea.sflag [#allocation4], %s915
          %s917 = sand.u32 %s142, 1
          %s918 = smul.addr %s917, 8
          %s919 = scalar_lea.vmem [#allocation8], %s918
          %920 = dma.done %s916, 128
        $region64: #{tpu_custom_call.1} parent=59 // pred_fallthru
          _
      $region60: #{tpu_custom_call.1} parent=5 // pred_fallthru
        _
    $region6: #{tpu_custom_call.1} parent=1 // loop_footer
      %s22 = sadd.s32 1, %s18
    $region7: #{tpu_custom_call.1} parent=1 // loop_footer_branch
      %17 = sbr.rel target = $region3
    $region8: #{tpu_custom_call.1} parent=1 // loop_exit
      _
    %921 = vsyncpa [#allocation3], 1
    %s922 = scalar_lea.sflag [#allocation3], 1
    %923 = vsyncpa %s922, 1
    %924 = vsyncpa [#allocation6], 1
    %925 = vsyncpa [#allocation4], 1
    %s926 = scalar_lea.sflag [#allocation4], 1
    %927 = vsyncpa %s926, 1

</llo_original>
